<compile_context>
chip_gen: v7x
topology: tpu7x:2x2x1
jax: 0.10.0
libtpu: 0.0.40
codegen_flags: <defaults>
</compile_context>

<pallas_src>
import functools

import jax
import jax.numpy as jnp
from jax import lax
from jax.experimental import pallas as pl
from jax.experimental.pallas import tpu as pltpu

LANES = 128
MAX_BLOCK_ROWS = 2048   # 2048x128 f32 = 1 MiB / input block; ~6 MiB VMEM total
NUM_SHARDS = 2          # leading "parallel" axis (2 TCs on v7x; harmless on 1-TC chips)


def _dice_kernel(p_ref, l_ref, inter_ref, sum_ref, acc_pl, acc_sum,
                 *, block_rows, steps_per_shard, n_valid, need_mask):
    s = pl.program_id(0)   # shard ("parallel")
    i = pl.program_id(1)   # reduction step within shard ("arbitrary")

    # Init block-shaped accumulators at the start of each shard's reduction.
    @pl.when(i == 0)
    def _():
        acc_pl[...] = jnp.zeros_like(acc_pl)
        acc_sum[...] = jnp.zeros_like(acc_sum)

    p = p_ref[...].astype(jnp.float32)
    l = l_ref[...].astype(jnp.float32)

    if need_mask:
        # Mask elements past the valid flattened length (ragged tail block and
        # shard over-coverage, whose block index was clamped in the index_map).
        step = s * steps_per_shard + i
        row = lax.broadcasted_iota(jnp.int32, (block_rows, LANES), 0)
        lane = lax.broadcasted_iota(jnp.int32, (block_rows, LANES), 1)
        flat = (step * block_rows + row) * LANES + lane
        mask = flat < n_valid
        p = jnp.where(mask, p, 0.0)
        l = jnp.where(mask, l, 0.0)

    # Hot path: pure elementwise (VPU) accumulation; no per-step reductions.
    acc_pl[...] += p * l          # -> intersection
    acc_sum[...] += p + l         # -> sum(p) + sum(l)  (union)

    # One cross-lane/sublane reduction per shard, at the end.
    @pl.when(i == pl.num_programs(1) - 1)
    def _():
        inter_ref[...] = jnp.sum(acc_pl[...], keepdims=True)
        sum_ref[...] = jnp.sum(acc_sum[...], keepdims=True)


def dice_loss(y_pred, labels, smooth=1.0):
    """Pallas TPU implementation of DiceLoss.forward."""
    p = jnp.ravel(y_pred)
    l = jnp.ravel(labels)
    assert p.size == l.size, "y_pred and labels must have the same number of elements"

    # Cast only non-arithmetic dtypes on the host side; float dtypes (f32/bf16)
    # are read in their native width and upcast inside the kernel.
    if p.dtype == jnp.bool_:
        p = p.astype(jnp.float32)
    if l.dtype == jnp.bool_:
        l = l.astype(jnp.float32)

    n = p.size
    # Pad only to a multiple of 128 lanes (needed for the lane-dense view).
    # For lane-aligned inputs (the common case) this is a no-op: no HBM copy.
    n128 = pl.cdiv(n, LANES) * LANES
    if n128 != n:
        p = jnp.pad(p, (0, n128 - n))
        l = jnp.pad(l, (0, n128 - n))
    rows = n128 // LANES

    block_rows = min(MAX_BLOCK_ROWS, ((rows + 7) // 8) * 8)
    total_steps = pl.cdiv(rows, block_rows)
    num_shards = NUM_SHARDS if total_steps >= NUM_SHARDS else 1
    steps_per_shard = pl.cdiv(total_steps, num_shards)

    covered_elems = num_shards * steps_per_shard * block_rows * LANES
    need_mask = covered_elems != n

    p2d = p.reshape(rows, LANES)
    l2d = l.reshape(rows, LANES)

    kernel = functools.partial(
        _dice_kernel,
        block_rows=block_rows,
        steps_per_shard=steps_per_shard,
        n_valid=n,
        need_mask=need_mask,
    )

    def in_map(sh, st):
        # Clamp so over-coverage steps never read a fully-OOB block; their
        # contribution is zeroed by the in-kernel mask.
        return (jnp.minimum(sh * steps_per_shard + st, total_steps - 1), 0)

    out_map = lambda sh, st: (sh, 0, 0)

    inter_part, sum_part = pl.pallas_call(
        kernel,
        out_shape=(
            jax.ShapeDtypeStruct((num_shards, 1, 1), jnp.float32),
            jax.ShapeDtypeStruct((num_shards, 1, 1), jnp.float32),
        ),
        grid_spec=pltpu.PrefetchScalarGridSpec(
            num_scalar_prefetch=0,
            grid=(num_shards, steps_per_shard),
            in_specs=[
                pl.BlockSpec((block_rows, LANES), in_map),
                pl.BlockSpec((block_rows, LANES), in_map),
            ],
            out_specs=(
                pl.BlockSpec((None, 1, 1), out_map),
                pl.BlockSpec((None, 1, 1), out_map),
            ),
            scratch_shapes=[
                pltpu.VMEM((block_rows, LANES), jnp.float32),  # running p*l
                pltpu.VMEM((block_rows, LANES), jnp.float32),  # running p+l
            ],
        ),
        compiler_params=pltpu.CompilerParams(
            dimension_semantics=("parallel", "arbitrary"),
        ),
    )(p2d, l2d)

    s = jnp.float32(smooth)
    intersection = jnp.sum(inter_part) + s
    union = jnp.sum(sum_part) + s
    return 1.0 - 2.0 * (intersection / union)


def _dice_loss_ref(y_pred, labels, smooth=1.0):
    p = jnp.ravel(y_pred).astype(jnp.float32)
    l = jnp.ravel(labels).astype(jnp.float32)
    intersection = jnp.sum(p * l) + smooth
    union = jnp.sum(p) + jnp.sum(l) + smooth
    return 1.0 - 2.0 * (intersection / union)


if __name__ == "__main__":
    key = jax.random.PRNGKey(0)
    k1, k2 = jax.random.split(key)

    # Small shapes consistent with a U-Net segmentation output: NCHW [2, 4, 16, 16]
    y_pred = jax.nn.sigmoid(jax.random.normal(k1, (2, 4, 16, 16), dtype=jnp.float32))
    labels = (jax.random.uniform(k2, (2, 4, 16, 16)) > 0.5).astype(jnp.float32)

    loss = jax.block_until_ready(dice_loss(y_pred, labels))
    ref = jax.block_until_ready(_dice_loss_ref(y_pred, labels))

    assert jnp.allclose(loss, ref, atol=1e-5, rtol=1e-5), (loss, ref)
    print("KERNEL_OK")
</pallas_src>

<mosaic_0001>
module attributes {stable_mosaic.version = 11 : i64} {
  func.func @_dice_kernel(%arg0: i32, %arg1: i32, %arg2: memref<16x128xf32, #tpu.memory_space<vmem>>, %arg3: memref<16x128xf32, #tpu.memory_space<vmem>>, %arg4: memref<1x1x1xf32, #tpu.memory_space<vmem>>, %arg5: memref<1x1x1xf32, #tpu.memory_space<vmem>>, %arg6: memref<16x128xf32, #tpu.memory_space<vmem>>, %arg7: memref<16x128xf32, #tpu.memory_space<vmem>>) attributes {dimension_semantics = [#tpu.dimension_semantics<parallel>, #tpu.dimension_semantics<arbitrary>], iteration_bounds = array<i64: 1, 1>, scalar_prefetch = 0 : i64, scratch_operands = 2 : i64, tpu.core_type = #tpu.core_type<tc>, window_params = [{transform_indices = @transform_0, window_bounds = array<i64: 16, 128>}, {transform_indices = @transform_1, window_bounds = array<i64: 16, 128>}, {transform_indices = @transform_2, window_bounds = array<i64: 1, 1, 1>}, {transform_indices = @transform_3, window_bounds = array<i64: 1, 1, 1>}]} {
    %c0_i32 = arith.constant 0 : i32
    %0 = arith.cmpi eq, %arg1, %c0_i32 : i32
    %1 = arith.extui %0 : i1 to i32
    %c0_i32_0 = arith.constant 0 : i32
    %2 = arith.cmpi ne, %1, %c0_i32_0 : i32
    scf.if %2 {
      %cst = arith.constant 0.000000e+00 : f32
      %16 = vector.broadcast %cst : f32 to vector<16x128xf32>
      %c0_14 = arith.constant 0 : index
      %c0_15 = arith.constant 0 : index
      %17 = vector.load %arg6[%c0_14, %c0_15] : memref<16x128xf32, #tpu.memory_space<vmem>>, vector<16x128xf32>
      tpu.vector_store %arg6[%c0_14, %c0_15], %16 {strides = array<i32>} : memref<16x128xf32, #tpu.memory_space<vmem>>, vector<16x128xf32>,
      %cst_16 = arith.constant 0.000000e+00 : f32
      %18 = vector.broadcast %cst_16 : f32 to vector<16x128xf32>
      %c0_17 = arith.constant 0 : index
      %c0_18 = arith.constant 0 : index
      %19 = vector.load %arg7[%c0_17, %c0_18] : memref<16x128xf32, #tpu.memory_space<vmem>>, vector<16x128xf32>
      tpu.vector_store %arg7[%c0_17, %c0_18], %18 {strides = array<i32>} : memref<16x128xf32, #tpu.memory_space<vmem>>, vector<16x128xf32>,
    } else {
    }
    %c0 = arith.constant 0 : index
    %c0_1 = arith.constant 0 : index
    %3 = vector.load %arg2[%c0, %c0_1] : memref<16x128xf32, #tpu.memory_space<vmem>>, vector<16x128xf32>
    %c0_2 = arith.constant 0 : index
    %c0_3 = arith.constant 0 : index
    %4 = vector.load %arg3[%c0_2, %c0_3] : memref<16x128xf32, #tpu.memory_space<vmem>>, vector<16x128xf32>
    %c0_4 = arith.constant 0 : index
    %c0_5 = arith.constant 0 : index
    %5 = vector.load %arg6[%c0_4, %c0_5] : memref<16x128xf32, #tpu.memory_space<vmem>>, vector<16x128xf32>
    %6 = arith.mulf %3, %4 : vector<16x128xf32>
    %7 = arith.addf %5, %6 : vector<16x128xf32>
    %c0_6 = arith.constant 0 : index
    %c0_7 = arith.constant 0 : index
    %8 = vector.load %arg6[%c0_6, %c0_7] : memref<16x128xf32, #tpu.memory_space<vmem>>, vector<16x128xf32>
    tpu.vector_store %arg6[%c0_6, %c0_7], %7 {strides = array<i32>} : memref<16x128xf32, #tpu.memory_space<vmem>>, vector<16x128xf32>,
    %c0_8 = arith.constant 0 : index
    %c0_9 = arith.constant 0 : index
    %9 = vector.load %arg7[%c0_8, %c0_9] : memref<16x128xf32, #tpu.memory_space<vmem>>, vector<16x128xf32>
    %10 = arith.addf %3, %4 : vector<16x128xf32>
    %11 = arith.addf %9, %10 : vector<16x128xf32>
    %c0_10 = arith.constant 0 : index
    %c0_11 = arith.constant 0 : index
    %12 = vector.load %arg7[%c0_10, %c0_11] : memref<16x128xf32, #tpu.memory_space<vmem>>, vector<16x128xf32>
    tpu.vector_store %arg7[%c0_10, %c0_11], %11 {strides = array<i32>} : memref<16x128xf32, #tpu.memory_space<vmem>>, vector<16x128xf32>,
    %c0_i32_12 = arith.constant 0 : i32
    %13 = arith.cmpi eq, %arg1, %c0_i32_12 : i32
    %14 = arith.extui %13 : i1 to i32
    %c0_i32_13 = arith.constant 0 : i32
    %15 = arith.cmpi ne, %14, %c0_i32_13 : i32
    scf.if %15 {
      %c0_14 = arith.constant 0 : index
      %c0_15 = arith.constant 0 : index
      %16 = vector.load %arg6[%c0_14, %c0_15] : memref<16x128xf32, #tpu.memory_space<vmem>>, vector<16x128xf32>
      %17 = vector.shape_cast %16 : vector<16x128xf32> to vector<1x16x128xf32>
      %cst = arith.constant dense<0.000000e+00> : vector<1xf32>
      %18 = vector.multi_reduction <add>, %17, %cst [1, 2] : vector<1x16x128xf32> to vector<1xf32>
      %19 = vector.shape_cast %18 : vector<1xf32> to vector<1x1x1xf32>
      %20 = vector.extract %19[0, 0, 0] : f32 from vector<1x1x1xf32>
      %21 = vector.broadcast %20 : f32 to vector<1x1xf32>
      %c0_16 = arith.constant 0 : index
      %c0_17 = arith.constant 0 : index
      %c0_18 = arith.constant 0 : index
      %22 = vector.load %arg4[%c0_16, %c0_17, %c0_18] : memref<1x1x1xf32, #tpu.memory_space<vmem>>, vector<1x1x1xf32>
      %23 = vector.shape_cast %22 : vector<1x1x1xf32> to vector<1x1xf32>
      %24 = vector.shape_cast %21 : vector<1x1xf32> to vector<1x1x1xf32>
      tpu.vector_store %arg4[%c0_16, %c0_17, %c0_18], %24 {strides = array<i32>} : memref<1x1x1xf32, #tpu.memory_space<vmem>>, vector<1x1x1xf32>,
      %c0_19 = arith.constant 0 : index
      %c0_20 = arith.constant 0 : index
      %25 = vector.load %arg7[%c0_19, %c0_20] : memref<16x128xf32, #tpu.memory_space<vmem>>, vector<16x128xf32>
      %26 = vector.shape_cast %25 : vector<16x128xf32> to vector<1x16x128xf32>
      %cst_21 = arith.constant dense<0.000000e+00> : vector<1xf32>
      %27 = vector.multi_reduction <add>, %26, %cst_21 [1, 2] : vector<1x16x128xf32> to vector<1xf32>
      %28 = vector.shape_cast %27 : vector<1xf32> to vector<1x1x1xf32>
      %29 = vector.extract %28[0, 0, 0] : f32 from vector<1x1x1xf32>
      %30 = vector.broadcast %29 : f32 to vector<1x1xf32>
      %c0_22 = arith.constant 0 : index
      %c0_23 = arith.constant 0 : index
      %c0_24 = arith.constant 0 : index
      %31 = vector.load %arg5[%c0_22, %c0_23, %c0_24] : memref<1x1x1xf32, #tpu.memory_space<vmem>>, vector<1x1x1xf32>
      %32 = vector.shape_cast %31 : vector<1x1x1xf32> to vector<1x1xf32>
      %33 = vector.shape_cast %30 : vector<1x1xf32> to vector<1x1x1xf32>
      tpu.vector_store %arg5[%c0_22, %c0_23, %c0_24], %33 {strides = array<i32>} : memref<1x1x1xf32, #tpu.memory_space<vmem>>, vector<1x1x1xf32>,
    } else {
    }
    return
  }
  func.func @transform_0(%arg0: i32, %arg1: i32) -> (i32, i32) {
    %c1_i32 = arith.constant 1 : i32
    %0 = arith.muli %arg0, %c1_i32 : i32
    %1 = arith.addi %0, %arg1 : i32
    %c0_i32 = arith.constant 0 : i32
    %2 = arith.minsi %1, %c0_i32 : i32
    %c0_i32_0 = arith.constant 0 : i32
    %c0_i32_1 = arith.constant 0 : i32
    return %2, %c0_i32_0 : i32, i32
  }
  func.func @transform_1(%arg0: i32, %arg1: i32) -> (i32, i32) {
    %c1_i32 = arith.constant 1 : i32
    %0 = arith.muli %arg0, %c1_i32 : i32
    %1 = arith.addi %0, %arg1 : i32
    %c0_i32 = arith.constant 0 : i32
    %2 = arith.minsi %1, %c0_i32 : i32
    %c0_i32_0 = arith.constant 0 : i32
    %c0_i32_1 = arith.constant 0 : i32
    return %2, %c0_i32_0 : i32, i32
  }
  func.func @transform_2(%arg0: i32, %arg1: i32) -> (i32, i32, i32) {
    %c0_i32 = arith.constant 0 : i32
    %c0_i32_0 = arith.constant 0 : i32
    %c0_i32_1 = arith.constant 0 : i32
    return %arg0, %c0_i32, %c0_i32_0 : i32, i32, i32
  }
  func.func @transform_3(%arg0: i32, %arg1: i32) -> (i32, i32, i32) {
    %c0_i32 = arith.constant 0 : i32
    %c0_i32_0 = arith.constant 0 : i32
    %c0_i32_1 = arith.constant 0 : i32
    return %arg0, %c0_i32, %c0_i32_0 : i32, i32, i32
  }
}

</mosaic_0001>

<llo_original>
// kernel: tpu_custom_call.1
$region0: #{tpu_custom_call.1}
  #allocation0 [shape = 'u32[]', space=smem, size = 0x4, offset = 0x4, fixed_abs, tag = 'smem constant byte address 0x4 - core index']
  #allocation1 [shape = 'u32[144,128]{1,0:T(1,128)}', space=vmem, size = 0x12000, scoped, tag = 'internal scratch']
  #allocation2 [shape = 'f32[16,128]{1,0:T(8,128)}', space=vmem, size = 0x2000, scoped, tag = 'scratch operand']
  #allocation3 [shape = 'f32[16,128]{1,0:T(8,128)}', space=vmem, size = 0x2000, scoped, tag = 'scratch operand']
  %s0 = inlined_call_operand.hbm [shape: f32[16,128], index: 0, kind: input, shape index: {}]
  %s1 = inlined_call_operand.hbm [shape: f32[16,128], index: 1, kind: input, shape index: {}]
  %s2 = inlined_call_operand.hbm [shape: f32[1,1,1], index: 2, kind: output, shape index: {0}]
  %s3 = inlined_call_operand.hbm [shape: f32[1,1,1], index: 3, kind: output, shape index: {1}]
  %4 = xla_tuple %s2, %s3
  %s5 = sld [smem:[#allocation0]]
  $region42: #{tpu_custom_call.1} parent=0
    _
  %s7 = ssub.s32 1, %s5
  %s8 = scalar_select 0, %s7, %s5
  $region1: #{tpu_custom_call.1} parent=0
    #allocation4 [shape = 'u8[8192]{0}', space=vmem, size = 0x2000, scoped, tag = 'input window, operand 0, single buffered']
    #allocation5 [shape = 's32[1]{0}', space=sflag, size = 0x4, scoped, tag = 'scoped memory for tpu_custom_call.1']
    #allocation6 [shape = 's32[1]{0}', space=sflag, size = 0x4, scoped, tag = 'scoped memory for tpu_custom_call.1']
    #allocation7 [shape = 'u8[8192]{0}', space=vmem, size = 0x2000, scoped, tag = 'input window, operand 1, single buffered']
    #allocation8 [shape = 's32[1]{0}', space=sflag, size = 0x4, scoped, tag = 'scoped memory for tpu_custom_call.1']
    #allocation9 [shape = 'u8[512]{0}', space=vmem, size = 0x400, scoped, tag = 'output window, operand 0, single buffered']
    #allocation10 [shape = 'u8[512]{0}', space=vmem, size = 0x400, scoped, tag = 'output window, operand 1, single buffered']
    #allocation11 [shape = 's32[1]{0}', space=sflag, size = 0x4, scoped, tag = 'scoped memory for tpu_custom_call.1']
    %9 = vsyncpa [#allocation5], 0
    %10 = vsyncpa [#allocation8], 0
    %11 = vsyncpa [#allocation6], 0
    %12 = vsyncpa [#allocation11], 0
    // Predicated region
    $region2: #{tpu_custom_call.1} parent=1 // pred_check
      _
    $region3: #{tpu_custom_call.1} parent=1 // pred_check_branch
      %14 = sbr.rel (0) target = $region5
    $region4: #{tpu_custom_call.1} parent=1 // pred_region
      %s15 = sadd.s32 0, 0
      %p16 = scmp.lt.s32.totalorder %s15, 0
      %s17 = scalar_select %p16, %s15, 0
      %s18 = smul.u32 2, %s17
      %s20 = ssub.s32 256, 256
      %21 = vsyncadd [#allocation5], %s20
      %s22 = smul.addr %s18, 128
      %s23 = scalar_lea.hbm %s0, %s22
      %s24 = sshll.u32 [#allocation4], 4
      %s25 = int_to_ptr.vmem [resolvable:$true] %s24
      %30 = dma.hbm_to_vmem [thread:$0]  %s23, 256, %s25, [#allocation5], 128, 128, 8
    $region5: #{tpu_custom_call.1} parent=1 // pred_fallthru
      _
    // Predicated region
    $region6: #{tpu_custom_call.1} parent=1 // pred_check
      _
    $region7: #{tpu_custom_call.1} parent=1 // pred_check_branch
      %32 = sbr.rel (0) target = $region9
    $region8: #{tpu_custom_call.1} parent=1 // pred_region
      %s33 = sadd.s32 0, 0
      %p34 = scmp.lt.s32.totalorder %s33, 0
      %s35 = scalar_select %p34, %s33, 0
      %s36 = smul.u32 2, %s35
      %s38 = ssub.s32 256, 256
      %39 = vsyncadd [#allocation8], %s38
      %s40 = smul.addr %s36, 128
      %s41 = scalar_lea.hbm %s1, %s40
      %s42 = sshll.u32 [#allocation7], 4
      %s43 = int_to_ptr.vmem [resolvable:$true] %s42
      %48 = dma.hbm_to_vmem [thread:$0]  %s41, 256, %s43, [#allocation8], 128, 128, 8
    $region9: #{tpu_custom_call.1} parent=1 // pred_fallthru
      _
    // Predicated region
    $region10: #{tpu_custom_call.1} parent=1 // pred_check
      _
    $region11: #{tpu_custom_call.1} parent=1 // pred_check_branch
      %50 = sbr.rel (0) target = $region13
    $region12: #{tpu_custom_call.1} parent=1 // pred_region
      %51 = dma.done [#allocation5], 256
    $region13: #{tpu_custom_call.1} parent=1 // pred_fallthru
      _
    // Predicated region
    $region14: #{tpu_custom_call.1} parent=1 // pred_check
      _
    $region15: #{tpu_custom_call.1} parent=1 // pred_check_branch
      %53 = sbr.rel (0) target = $region17
    $region16: #{tpu_custom_call.1} parent=1 // pred_region
      %54 = dma.done [#allocation8], 256
    $region17: #{tpu_custom_call.1} parent=1 // pred_fallthru
      _
    %s55 = sadd.s32 0, 0
    %p56 = scmp.lt.s32.totalorder %s55, 0
    %s57 = scalar_select %p56, %s55, 0
    %s58 = smul.u32 2, %s57
    %s59 = sadd.s32 0, 0
    %p60 = scmp.lt.s32.totalorder %s59, 0
    %s61 = scalar_select %p60, %s59, 0
    %s62 = smul.u32 2, %s61
    %p63 = scmp.eq.s32.totalorder 0, 0
    // Predicated region
    $region18: #{tpu_custom_call.1} parent=1 // pred_check
      %p64 = pneg %p63
    $region19: #{tpu_custom_call.1} parent=1 // pred_check_branch
      %66 = sbr.rel (%p64) target = $region21
    $region20: #{tpu_custom_call.1} parent=1 // pred_region
      %67 = vst [vmem:[#allocation2] sm:$0xff] 0.0
      %68 = vst [vmem:[#allocation2 + $0x8] sm:$0xff] 0.0
      %69 = vst [vmem:[#allocation3] sm:$0xff] 0.0
      %70 = vst [vmem:[#allocation3 + $0x8] sm:$0xff] 0.0
    $region21: #{tpu_custom_call.1} parent=1 // pred_fallthru
      _
    %v71 = vld [vmem:[#allocation4] sm:$0xff]
    %v72 = vld [vmem:[#allocation4 + $0x8] sm:$0xff]
    %v73 = vld [vmem:[#allocation7] sm:$0xff]
    %v74 = vld [vmem:[#allocation7 + $0x8] sm:$0xff]
    %v75 = vld [vmem:[#allocation2] sm:$0xff]
    %v76 = vld [vmem:[#allocation2 + $0x8] sm:$0xff]
    %v77 = vmul.f32 %v71, %v73
    %v78 = vmul.f32 %v72, %v74
    %v79 = vadd.f32 %v75, %v77
    %v80 = vadd.f32 %v76, %v78
    %81 = vst [vmem:[#allocation2] sm:$0xff] %v79
    %82 = vst [vmem:[#allocation2 + $0x8] sm:$0xff] %v80
    %v83 = vld [vmem:[#allocation3] sm:$0xff]
    %v84 = vld [vmem:[#allocation3 + $0x8] sm:$0xff]
    %v85 = vadd.f32 %v71, %v73
    %v86 = vadd.f32 %v72, %v74
    %v87 = vadd.f32 %v83, %v85
    %v88 = vadd.f32 %v84, %v86
    %89 = vst [vmem:[#allocation3] sm:$0xff] %v87
    %90 = vst [vmem:[#allocation3 + $0x8] sm:$0xff] %v88
    // Predicated region
    $region22: #{tpu_custom_call.1} parent=1 // pred_check
      %p91 = pneg %p63
    $region23: #{tpu_custom_call.1} parent=1 // pred_check_branch
      %93 = sbr.rel (%p91) target = $region25
    $region24: #{tpu_custom_call.1} parent=1 // pred_region
      %v94 = vld [vmem:[#allocation2] sm:$0xff]
      %v95 = vld [vmem:[#allocation2 + $0x8] sm:$0xff]
      %v96 = vadd.f32 %v94, %v95
      %97 = vadd.xlane.f32.xlu0 %v96
      %v98 = vpop.xlane.xlu0 %97
      %v99 = vrot.slane %v98, 4
      %v100 = vadd.f32 %v98, %v99
      %v101 = vrot.slane %v100, 2
      %v102 = vadd.f32 %v100, %v101
      %v103 = vrot.slane %v102, 1
      %v104 = vadd.f32 %v102, %v103
      %s105 = vtos %v104
      %v106 = vstv %s105
      %vm107 = vcmask 0
      %108 = vst.msk [vmem:[#allocation9] sm:$0x1] %vm107, %v106
      %v109 = vld [vmem:[#allocation3] sm:$0xff]
      %v110 = vld [vmem:[#allocation3 + $0x8] sm:$0xff]
      %v111 = vadd.f32 %v109, %v110
      %112 = vadd.xlane.f32.xlu0 %v111
      %v113 = vpop.xlane.xlu0 %112
      %v114 = vrot.slane %v113, 4
      %v115 = vadd.f32 %v113, %v114
      %v116 = vrot.slane %v115, 2
      %v117 = vadd.f32 %v115, %v116
      %v118 = vrot.slane %v117, 1
      %v119 = vadd.f32 %v117, %v118
      %s120 = vtos %v119
      %v121 = vstv %s120
      %122 = vst.msk [vmem:[#allocation10] sm:$0x1] %vm107, %v121
    $region25: #{tpu_custom_call.1} parent=1 // pred_fallthru
      _
    // Predicated region
    $region26: #{tpu_custom_call.1} parent=1 // pred_check
      _
    $region27: #{tpu_custom_call.1} parent=1 // pred_check_branch
      %124 = sbr.rel (0) target = $region29
    $region28: #{tpu_custom_call.1} parent=1 // pred_region
      %s126 = ssub.s32 16, 16
      %127 = vsyncadd [#allocation6], %s126
      %s129 = sshll.u32 [#allocation9], 4
      %s130 = int_to_ptr.vmem [resolvable:$true] %s129
      %132 = dma.vmem_to_hbm [thread:$0]  %s130, 16, %s2, [#allocation6]
    $region29: #{tpu_custom_call.1} parent=1 // pred_fallthru
      _
    // Predicated region
    $region30: #{tpu_custom_call.1} parent=1 // pred_check
      _
    $region31: #{tpu_custom_call.1} parent=1 // pred_check_branch
      %134 = sbr.rel (0) target = $region33
    $region32: #{tpu_custom_call.1} parent=1 // pred_region
      %s136 = ssub.s32 16, 16
      %137 = vsyncadd [#allocation11], %s136
      %s139 = sshll.u32 [#allocation10], 4
      %s140 = int_to_ptr.vmem [resolvable:$true] %s139
      %142 = dma.vmem_to_hbm [thread:$0]  %s140, 16, %s3, [#allocation11]
    $region33: #{tpu_custom_call.1} parent=1 // pred_fallthru
      _
    // Predicated region
    $region34: #{tpu_custom_call.1} parent=1 // pred_check
      _
    $region35: #{tpu_custom_call.1} parent=1 // pred_check_branch
      %144 = sbr.rel (0) target = $region37
    $region36: #{tpu_custom_call.1} parent=1 // pred_region
      %145 = dma.done [#allocation6], 16
    $region37: #{tpu_custom_call.1} parent=1 // pred_fallthru
      _
    // Predicated region
    $region38: #{tpu_custom_call.1} parent=1 // pred_check
      _
    $region39: #{tpu_custom_call.1} parent=1 // pred_check_branch
      %147 = sbr.rel (0) target = $region41
    $region40: #{tpu_custom_call.1} parent=1 // pred_region
      %148 = dma.done [#allocation11], 16
    $region41: #{tpu_custom_call.1} parent=1 // pred_fallthru
      _
    %149 = vsyncpa [#allocation5], 1
    %150 = vsyncpa [#allocation8], 1
    %151 = vsyncpa [#allocation6], 1
    %152 = vsyncpa [#allocation11], 1

</llo_original>
